<compile_context>
chip_gen: v5e
topology: v5e:2x2
jax: 0.10.0
libtpu: 0.0.40
codegen_flags: <defaults>
</compile_context>

<pallas_src>
import functools

import jax
import jax.numpy as jnp
from jax import lax
from jax.experimental import pallas as pl
from jax.experimental.pallas import tpu as pltpu

LANE = 128


def _huber_partial_kernel(yp_ref, yt_ref, out_ref, *, delta, valid_rows,
                          tile_rows, needs_mask):
    # Compute in f32 regardless of the stored dtype (no-op cast for f32 inputs).
    yp = yp_ref[...].astype(jnp.float32)
    yt = yt_ref[...].astype(jnp.float32)
    err = yt - yp
    if needs_mask:
        # The last grid block extends past the real row count; rows beyond
        # `valid_rows` hold undefined data, so zero their error (cheap VPU
        # iota/cmp/select, fully hidden under the HBM-bound DMA stream).
        row_ids = pl.program_id(0) * tile_rows + lax.broadcasted_iota(
            jnp.int32, err.shape, 0)
        err = jnp.where(row_ids < valid_rows, err, 0.0)
    abs_err = jnp.abs(err)
    quadratic = jnp.minimum(abs_err, delta)   # clamp(abs_err, max=delta)
    linear = abs_err - quadratic
    loss = 0.5 * quadratic * quadratic + delta * linear
    # One cross-sublane reduce per block -> lane-dense (1, 128) partial sum.
    out_ref[...] = jnp.sum(loss, axis=0, keepdims=True)


def huber_loss(y_pred, y_true, delta=0.01, tile_rows=2048):
    assert y_pred.shape == y_true.shape
    n_elems = y_pred.size
    delta = float(delta)

    yp = jnp.ravel(y_pred)
    yt = jnp.ravel(y_true)

    # Sublane multiple for the block's row dim, based on packing of the
    # narrowest input dtype (f32 -> 8, bf16/f16 -> 16, int8/fp8 -> 32).
    itemsize = min(jnp.dtype(yp.dtype).itemsize, jnp.dtype(yt.dtype).itemsize)
    mult = {4: 8, 2: 16, 1: 32}.get(itemsize, 8)

    rows = pl.cdiv(n_elems, LANE)                       # rows needed for all elems
    tr = max(mult, min(tile_rows, ((rows + mult - 1) // mult) * mult))
    num_blocks = pl.cdiv(rows, tr)

    if num_blocks == 1:
        # Sub-tile input: pad fully to one tile (tiny copy), no in-kernel mask
        # (zero-padded tails contribute exactly zero loss).
        padded_rows = tr
        needs_mask = False
    else:
        # Large input: only pad to a multiple of 128 when strictly required for
        # the reshape; the ragged last row-block is masked inside the kernel,
        # avoiding a full extra HBM copy of both inputs.
        padded_rows = rows
        needs_mask = (rows % tr) != 0

    pad = padded_rows * LANE - n_elems
    if pad:
        yp = jnp.pad(yp, (0, pad))
        yt = jnp.pad(yt, (0, pad))
    yp = yp.reshape(padded_rows, LANE)
    yt = yt.reshape(padded_rows, LANE)

    partials = pl.pallas_call(
        functools.partial(
            _huber_partial_kernel,
            delta=delta,
            valid_rows=padded_rows if not needs_mask else rows,
            tile_rows=tr,
            needs_mask=needs_mask,
        ),
        out_shape=jax.ShapeDtypeStruct((num_blocks, LANE), jnp.float32),
        grid_spec=pltpu.PrefetchScalarGridSpec(
            num_scalar_prefetch=0,
            grid=(num_blocks,),
            in_specs=[
                pl.BlockSpec((tr, LANE), lambda i: (i, 0)),
                pl.BlockSpec((tr, LANE), lambda i: (i, 0)),
            ],
            out_specs=pl.BlockSpec((1, LANE), lambda i: (i, 0)),
        ),
        compiler_params=pltpu.CompilerParams(
            dimension_semantics=("parallel",),
        ),
    )(yp, yt)

    # Tiny final reduction + mean over the TRUE element count.
    return jnp.sum(partials) / jnp.float32(n_elems)


def huber_loss_ref(y_pred, y_true, delta=0.01):
    error = y_true.astype(jnp.float32) - y_pred.astype(jnp.float32)
    abs_error = jnp.abs(error)
    quadratic = jnp.minimum(abs_error, delta)
    linear = abs_error - quadratic
    loss = 0.5 * quadratic**2 + delta * linear
    return jnp.mean(loss)


if __name__ == "__main__":
    key = jax.random.PRNGKey(0)
    k1, k2 = jax.random.split(key)
    # Small synthetic shapes (e.g. batch of predictions).
    shape = (2, 4, 16, 16)
    y_pred = jax.random.normal(k1, shape, dtype=jnp.float32) * 0.05
    y_true = jax.random.normal(k2, shape, dtype=jnp.float32) * 0.05

    out = huber_loss(y_pred, y_true, delta=0.01)
    out = jax.block_until_ready(out)

    ref = huber_loss_ref(y_pred, y_true, delta=0.01)
    assert jnp.allclose(out, ref, rtol=1e-5, atol=1e-7), (out, ref)
    print("KERNEL_OK")
</pallas_src>

<mosaic_0001>
module attributes {stable_mosaic.version = 11 : i64} {
  func.func @_huber_partial_kernel(%arg0: i32, %arg1: memref<16x128xf32, #tpu.memory_space<vmem>>, %arg2: memref<16x128xf32, #tpu.memory_space<vmem>>, %arg3: memref<1x128xf32, #tpu.memory_space<vmem>>) attributes {dimension_semantics = [#tpu.dimension_semantics<parallel>], iteration_bounds = array<i64: 1>, scalar_prefetch = 0 : i64, scratch_operands = 0 : i64, tpu.core_type = #tpu.core_type<tc>, window_params = [{transform_indices = @transform_0, window_bounds = array<i64: 16, 128>}, {transform_indices = @transform_1, window_bounds = array<i64: 16, 128>}, {transform_indices = @transform_2, window_bounds = array<i64: 1, 128>}]} {
    %c0 = arith.constant 0 : index
    %c0_0 = arith.constant 0 : index
    %0 = vector.load %arg1[%c0, %c0_0] : memref<16x128xf32, #tpu.memory_space<vmem>>, vector<16x128xf32>
    %c0_1 = arith.constant 0 : index
    %c0_2 = arith.constant 0 : index
    %1 = vector.load %arg2[%c0_1, %c0_2] : memref<16x128xf32, #tpu.memory_space<vmem>>, vector<16x128xf32>
    %2 = arith.subf %1, %0 : vector<16x128xf32>
    %3 = math.absf %2 : vector<16x128xf32>
    %cst = arith.constant 0.00999999977 : f32
    %4 = vector.broadcast %cst : f32 to vector<16x128xf32>
    %5 = arith.minimumf %3, %4 : vector<16x128xf32>
    %6 = arith.subf %3, %5 : vector<16x128xf32>
    %cst_3 = arith.constant 5.000000e-01 : f32
    %7 = vector.broadcast %cst_3 : f32 to vector<16x128xf32>
    %8 = arith.mulf %7, %5 : vector<16x128xf32>
    %9 = arith.mulf %8, %5 : vector<16x128xf32>
    %cst_4 = arith.constant 0.00999999977 : f32
    %10 = vector.broadcast %cst_4 : f32 to vector<16x128xf32>
    %11 = arith.mulf %10, %6 : vector<16x128xf32>
    %12 = arith.addf %9, %11 : vector<16x128xf32>
    %cst_5 = arith.constant dense<0.000000e+00> : vector<128xf32>
    %13 = vector.multi_reduction <add>, %12, %cst_5 [0] : vector<16x128xf32> to vector<128xf32>
    %14 = vector.shape_cast %13 : vector<128xf32> to vector<1x128xf32>
    %c0_6 = arith.constant 0 : index
    %c0_7 = arith.constant 0 : index
    %15 = vector.load %arg3[%c0_6, %c0_7] : memref<1x128xf32, #tpu.memory_space<vmem>>, vector<1x128xf32>
    tpu.vector_store %arg3[%c0_6, %c0_7], %14 {strides = array<i32>} : memref<1x128xf32, #tpu.memory_space<vmem>>, vector<1x128xf32>,
    return
  }
  func.func @transform_0(%arg0: i32) -> (i32, i32) {
    %c0_i32 = arith.constant 0 : i32
    %c0_i32_0 = arith.constant 0 : i32
    return %arg0, %c0_i32 : i32, i32
  }
  func.func @transform_1(%arg0: i32) -> (i32, i32) {
    %c0_i32 = arith.constant 0 : i32
    %c0_i32_0 = arith.constant 0 : i32
    return %arg0, %c0_i32 : i32, i32
  }
  func.func @transform_2(%arg0: i32) -> (i32, i32) {
    %c0_i32 = arith.constant 0 : i32
    %c0_i32_0 = arith.constant 0 : i32
    return %arg0, %c0_i32 : i32, i32
  }
}

</mosaic_0001>

<llo_original>
// kernel: tpu_custom_call.1
$region0: #{tpu_custom_call.1}
  #allocation0 [shape = 'u32[]', space=smem, size = 0x4, offset = 0x4, fixed_abs, tag = 'smem constant byte address 0x4 - core index']
  #allocation1 [shape = 'u32[72,128]{1,0:T(1,128)}', space=vmem, size = 0x9000, scoped, tag = 'internal scratch']
  %s0 = inlined_call_operand.hbm [shape: f32[16,128], index: 0, kind: input, shape index: {}]
  %s1 = inlined_call_operand.hbm [shape: f32[16,128], index: 1, kind: input, shape index: {}]
  %s2 = inlined_call_operand.hbm [shape: f32[1,128], index: 2, kind: output, shape index: {}]
  %s3 = sld [smem:[#allocation0]]
  $region26: #{tpu_custom_call.1} parent=0
    _
  %s5 = ssub.s32 1, %s3
  %s6 = scalar_select 0, %s5, %s3
  $region1: #{tpu_custom_call.1} parent=0
    #allocation2 [shape = 'u8[8192]{0}', space=vmem, size = 0x2000, scoped, tag = 'input window, operand 0, single buffered']
    #allocation3 [shape = 's32[1]{0}', space=sflag, size = 0x4, scoped, tag = 'scoped memory for tpu_custom_call.1']
    #allocation4 [shape = 's32[1]{0}', space=sflag, size = 0x4, scoped, tag = 'scoped memory for tpu_custom_call.1']
    #allocation5 [shape = 'u8[8192]{0}', space=vmem, size = 0x2000, scoped, tag = 'input window, operand 1, single buffered']
    #allocation6 [shape = 's32[1]{0}', space=sflag, size = 0x4, scoped, tag = 'scoped memory for tpu_custom_call.1']
    #allocation7 [shape = 'u8[512]{0}', space=vmem, size = 0x400, scoped, tag = 'output window, operand 0, single buffered']
    %7 = vsyncpa [#allocation3], 0
    %8 = vsyncpa [#allocation6], 0
    %9 = vsyncpa [#allocation4], 0
    // Predicated region
    $region2: #{tpu_custom_call.1} parent=1 // pred_check
      _
    $region3: #{tpu_custom_call.1} parent=1 // pred_check_branch
      %11 = sbr.rel (0) target = $region5
    $region4: #{tpu_custom_call.1} parent=1 // pred_region
      %13 = vsyncadd [#allocation3], 0
      %s14 = sshll.u32 %s0, 4
      %s15 = int_to_ptr.hbm [resolvable:$true] %s14
      %s16 = sshll.u32 [#allocation2], 4
      %s17 = int_to_ptr.vmem [resolvable:$true] %s16
      %22 = dma.hbm_to_vmem [thread:$0]  %s15, 256, %s17, [#allocation3], 128, 128, 8
    $region5: #{tpu_custom_call.1} parent=1 // pred_fallthru
      _
    // Predicated region
    $region6: #{tpu_custom_call.1} parent=1 // pred_check
      _
    $region7: #{tpu_custom_call.1} parent=1 // pred_check_branch
      %24 = sbr.rel (0) target = $region9
    $region8: #{tpu_custom_call.1} parent=1 // pred_region
      %26 = vsyncadd [#allocation6], 0
      %s27 = sshll.u32 %s1, 4
      %s28 = int_to_ptr.hbm [resolvable:$true] %s27
      %s29 = sshll.u32 [#allocation5], 4
      %s30 = int_to_ptr.vmem [resolvable:$true] %s29
      %35 = dma.hbm_to_vmem [thread:$0]  %s28, 256, %s30, [#allocation6], 128, 128, 8
    $region9: #{tpu_custom_call.1} parent=1 // pred_fallthru
      _
    // Predicated region
    $region10: #{tpu_custom_call.1} parent=1 // pred_check
      _
    $region11: #{tpu_custom_call.1} parent=1 // pred_check_branch
      %37 = sbr.rel (0) target = $region13
    $region12: #{tpu_custom_call.1} parent=1 // pred_region
      %39 = dma.done [#allocation3], 256
    $region13: #{tpu_custom_call.1} parent=1 // pred_fallthru
      _
    // Predicated region
    $region14: #{tpu_custom_call.1} parent=1 // pred_check
      _
    $region15: #{tpu_custom_call.1} parent=1 // pred_check_branch
      %41 = sbr.rel (0) target = $region17
    $region16: #{tpu_custom_call.1} parent=1 // pred_region
      %43 = dma.done [#allocation6], 256
    $region17: #{tpu_custom_call.1} parent=1 // pred_fallthru
      _
    %v44 = vld [vmem:[#allocation2] sm:$0xff]
    %v45 = vld [vmem:[#allocation2 + $0x8] sm:$0xff]
    %v46 = vld [vmem:[#allocation5] sm:$0xff]
    %v47 = vld [vmem:[#allocation5 + $0x8] sm:$0xff]
    %v48 = vsub.f32 %v46, %v44
    %v49 = vsub.f32 %v47, %v45
    %v50 = vand.u32 2147483647, %v48
    %v51 = vand.u32 2147483647, %v49
    %v52 = vmin.f32 %v50, 0.01
    %v53 = vmin.f32 %v51, 0.01
    %v54 = vsub.f32 %v50, %v52
    %v55 = vsub.f32 %v51, %v53
    %v56 = vmul.f32 %v52, 0.5
    %v57 = vmul.f32 %v53, 0.5
    %v58 = vmul.f32 %v56, %v52
    %v59 = vmul.f32 %v57, %v53
    %v60 = vmul.f32 %v54, 0.01
    %v61 = vmul.f32 %v55, 0.01
    %v62 = vadd.f32 %v58, %v60
    %v63 = vadd.f32 %v59, %v61
    %v64 = vadd.f32 %v62, %v63
    %v65 = vrot.slane %v64, 4
    %v66 = vadd.f32 %v64, %v65
    %v67 = vrot.slane %v66, 2
    %v68 = vadd.f32 %v66, %v67
    %v69 = vrot.slane %v68, 1
    %v70 = vadd.f32 %v68, %v69
    %71 = vst [vmem:[#allocation7] sm:$0x1] %v70
    // Predicated region
    $region18: #{tpu_custom_call.1} parent=1 // pred_check
      _
    $region19: #{tpu_custom_call.1} parent=1 // pred_check_branch
      %73 = sbr.rel (0) target = $region21
    $region20: #{tpu_custom_call.1} parent=1 // pred_region
      %75 = vsyncadd [#allocation4], 0
      %s77 = sshll.u32 [#allocation7], 4
      %s78 = int_to_ptr.vmem [resolvable:$true] %s77
      %s79 = sshll.u32 %s2, 4
      %s80 = int_to_ptr.hbm [resolvable:$true] %s79
      %82 = dma.vmem_to_hbm [thread:$0]  %s78, 16, %s80, [#allocation4]
    $region21: #{tpu_custom_call.1} parent=1 // pred_fallthru
      _
    // Predicated region
    $region22: #{tpu_custom_call.1} parent=1 // pred_check
      _
    $region23: #{tpu_custom_call.1} parent=1 // pred_check_branch
      %84 = sbr.rel (0) target = $region25
    $region24: #{tpu_custom_call.1} parent=1 // pred_region
      %86 = dma.done [#allocation4], 16
    $region25: #{tpu_custom_call.1} parent=1 // pred_fallthru
      _
    %87 = vsyncpa [#allocation3], 1
    %88 = vsyncpa [#allocation6], 1
    %89 = vsyncpa [#allocation4], 1

</llo_original>
